<compile_context>
chip_gen: v7x
topology: tpu7x:2x2x1
jax: 0.10.0
libtpu: 0.0.40
codegen_flags: <defaults>
</compile_context>

<pallas_src>
import functools

import jax
import jax.numpy as jnp
from jax.experimental import pallas as pl
from jax.experimental.pallas import tpu as pltpu


# ----------------------------- Pallas kernel -------------------------------


def conf_block_kernel(
    x_ref, cnf_ref, w_fus_ref, w_pos_ref, w_feat_ref, bias_ref,
    out_ref, cnfo_ref, *, K, d, tt, pad, shift,
):
    # x_ref / cnf_ref: (C, T_pad) bf16, resident for the whole batch element.
    # out_ref / cnfo_ref: (C, tt) tiles, tt a multiple of 128 (lane dense).
    halo = d * (K - 1)
    tw = tt + halo
    base = pl.multiple_of(pl.program_id(1) * tt, 128)   # lane-aligned window start

    # One aligned dynamic-window load per input; all tap shifts below are small
    # static slices of these values (no extra HBM traffic, no unaligned loads).
    xw = x_ref[:, pl.ds(base, tw)]    # (C, tt+halo) bf16
    cw = cnf_ref[:, pl.ds(base, tw)]  # (C, tt+halo) bf16

    # Per-channel BN biases (BN scale already folded into the conv weights).
    bias_fus = bias_ref[:, 0:1]       # (C, 1) f32
    bias_pos = bias_ref[:, 1:2]
    bias_feat = bias_ref[:, 2:3]

    # FeatFusionConv: sigmoid(bn(conv_x(x) + conv_cnf(cnf))) as ONE matmul over
    # the channel-concatenated input [x | cnf] (tap-major rows).
    rhs_fus = jnp.concatenate(
        [v[:, k * d : k * d + tt] for k in range(K) for v in (xw, cw)], axis=0)
    fus = jnp.dot(w_fus_ref[...], rhs_fus,
                  preferred_element_type=jnp.float32) + bias_fus
    cnfo_ref[...] = jax.nn.sigmoid(fus).astype(cnfo_ref.dtype)

    # pos_conv(x * (1 + cnf)) -> BN -> ReLU.  bf16 VPU math (operands are
    # already bf16-rounded; v5e promotes internally, v6e/v7x run it natively).
    xc = xw * (1.0 + cw)
    rhs_pos = jnp.concatenate(
        [xc[:, k * d : k * d + tt] for k in range(K)], axis=0)
    h = jnp.dot(w_pos_ref[...], rhs_pos,
                preferred_element_type=jnp.float32) + bias_pos
    h = jnp.maximum(h, 0.0)

    # feat_conv (1x1) -> BN -> ReLU, plus the residual.  The residual is taken
    # from the resident x window (shift <= pad guarantees it stays in-window),
    # so no separate residual stream is read from HBM.
    f = jnp.dot(w_feat_ref[...], h.astype(jnp.bfloat16),
                preferred_element_type=jnp.float32) + bias_feat
    res = xw[:, pad + shift : pad + shift + tt].astype(jnp.float32)
    out_ref[...] = (res + jnp.maximum(f, 0.0)).astype(out_ref.dtype)


# ------------------------------- wrapper ------------------------------------


def _cdiv(a, b):
    return -(-a // b)


def _round_up(a, b):
    return _cdiv(a, b) * b


def _fold_bn(gamma, beta, mean, var, eps=1e-5):
    scale = gamma / jnp.sqrt(var + eps)
    return scale, beta - mean * scale


def _flatten_taps(w):
    """torch Conv1d weight (C_out, C_in, K) -> (C_out, K*C_in), tap-major."""
    c_out, c_in, k = w.shape
    return jnp.transpose(w, (0, 2, 1)).reshape(c_out, k * c_in)


def conf_conv_block_input_fusion(x_nct, cnf_nct, params, pad, shift, *,
                                 time_block=None, out_dtype=jnp.float32):
    """x_nct, cnf_nct: (N, C, T) float32 (PyTorch NCT layout).

    Returns (out, cnf_o), both (N, C, T - 2*pad) in `out_dtype` (NCT layout).
    """
    N, C, T = x_nct.shape
    d = params["dilation"]
    K = params["w_pos"].shape[2]          # torch Conv1d weight: (C_out, C_in, K)
    halo = d * (K - 1)
    t_out = T - halo
    assert T - 2 * pad == t_out, "pad must equal dilation*(kernel_size-1)/2"
    assert 0 <= pad + shift and shift <= pad
    assert C % 8 == 0, "channels must be a multiple of 8 (sublane axis)"

    # Time tile (output columns per grid step): multiple of 128 for lane-dense
    # stores and a wide MXU N dimension; capped around 512 so blocks stay well
    # under v7x's 64 MiB VMEM.
    if time_block is None:
        n_tiles = _cdiv(t_out, 512)
        tt = _round_up(_cdiv(t_out, n_tiles), 128)
    else:
        tt = _round_up(int(time_block), 128)
    num_tt = _cdiv(t_out, tt)
    t_out_pad = num_tt * tt              # padded output length (tile multiple)
    t_pad = t_out_pad + halo             # padded input length

    # Fold eval-mode BN scale into the conv weights (bf16); keep biases f32.
    scale_pos, bias_pos = _fold_bn(*params["bn_pos"])
    scale_fus, bias_fus = _fold_bn(*params["bn_fus"])
    scale_feat, bias_feat = _fold_bn(*params["bn_feat"])

    # Fused FeatFusionConv weight over channel-concatenated [x | cnf].
    w_fus = _flatten_taps(jnp.concatenate([params["w_x"], params["w_cnf"]],
                                          axis=1))                   # (C, K*2C)
    w_fus = (scale_fus[:, None] * w_fus).astype(jnp.bfloat16)
    w_pos = (scale_pos[:, None] * _flatten_taps(params["w_pos"])
             ).astype(jnp.bfloat16)                                  # (C, K*C)
    w_feat = (scale_feat[:, None] * params["w_feat"][:, :, 0]
              ).astype(jnp.bfloat16)                                 # (C, C)
    biases = jnp.stack([bias_fus, bias_pos, bias_feat], axis=1)      # (C, 3) f32

    # bf16 activations, zero-padded in time so every block divides exactly.
    x_bf = x_nct.astype(jnp.bfloat16)
    cnf_bf = cnf_nct.astype(jnp.bfloat16)
    if t_pad != T:
        padw = ((0, 0), (0, 0), (0, t_pad - T))
        x_bf = jnp.pad(x_bf, padw)
        cnf_bf = jnp.pad(cnf_bf, padw)

    kernel = functools.partial(conf_block_kernel, K=K, d=d, tt=tt,
                               pad=pad, shift=shift)

    # Explicit VMEM budget: double-buffered in/out blocks + weights + headroom
    # for in-kernel im2col/intermediate temporaries.  Clamp to v7x's 64 MiB.
    out_isz = jnp.dtype(out_dtype).itemsize
    blk_in = C * t_pad * 2
    blk_out = C * tt * out_isz
    wbytes = (w_fus.size + w_pos.size + w_feat.size) * 2 + biases.size * 4
    tmps = (3 * K * C * tt + 2 * C * (tt + halo)) * 2 + 4 * C * tt * 4
    vmem_limit = int(min(64 << 20,
                         max(32 << 20, 2 * (4 * blk_in + 4 * blk_out + wbytes + tmps))))

    out, cnf_o = pl.pallas_call(
        kernel,
        out_shape=(
            jax.ShapeDtypeStruct((N, C, t_out_pad), out_dtype),
            jax.ShapeDtypeStruct((N, C, t_out_pad), out_dtype),
        ),
        grid_spec=pltpu.PrefetchScalarGridSpec(
            num_scalar_prefetch=0,
            grid=(N, num_tt),
            in_specs=[
                # x / cnf: resident per batch element (constant along the inner
                # time axis -> DMA'd once per n).
                pl.BlockSpec((None, C, t_pad), lambda n, t: (n, 0, 0)),   # x   bf16
                pl.BlockSpec((None, C, t_pad), lambda n, t: (n, 0, 0)),   # cnf bf16
                pl.BlockSpec((C, K * 2 * C), lambda n, t: (0, 0)),        # w_fus
                pl.BlockSpec((C, K * C), lambda n, t: (0, 0)),            # w_pos
                pl.BlockSpec((C, C), lambda n, t: (0, 0)),                # w_feat 1x1
                pl.BlockSpec((C, 3), lambda n, t: (0, 0)),                # BN biases
            ],
            out_specs=[
                pl.BlockSpec((None, C, tt), lambda n, t: (n, 0, t)),
                pl.BlockSpec((None, C, tt), lambda n, t: (n, 0, t)),
            ],
        ),
        compiler_params=pltpu.CompilerParams(
            dimension_semantics=("parallel", "parallel"),
            vmem_limit_bytes=vmem_limit),
    )(x_bf, cnf_bf, w_fus, w_pos, w_feat, biases)

    # Drop the time padding (no-op when t_out is already a tile multiple).
    return out[:, :, :t_out], cnf_o[:, :, :t_out]


# ---------------------------- pure-JAX reference ----------------------------


def _conv1d_nct(x, w, d):
    return jax.lax.conv_general_dilated(
        x, w, window_strides=(1,), padding="VALID",
        rhs_dilation=(d,), dimension_numbers=("NCH", "OIH", "NCH"))


def _bn_eval_nct(y, gamma, beta, mean, var, eps=1e-5):
    inv = 1.0 / jnp.sqrt(var + eps)
    return (y - mean[None, :, None]) * inv[None, :, None] * gamma[None, :, None] \
        + beta[None, :, None]


def reference(x, cnf, p, pad, shift):
    T = x.shape[2]
    d = p["dilation"]
    res = x[:, :, pad + shift : T - pad + shift]
    fus = _conv1d_nct(x, p["w_x"], d) + _conv1d_nct(cnf, p["w_cnf"], d)
    cnf_o = jax.nn.sigmoid(_bn_eval_nct(fus, *p["bn_fus"]))
    h = jax.nn.relu(_bn_eval_nct(_conv1d_nct(x * (1.0 + cnf), p["w_pos"], d),
                                 *p["bn_pos"]))
    f = jax.nn.relu(_bn_eval_nct(_conv1d_nct(h, p["w_feat"], 1), *p["bn_feat"]))
    return res + f, cnf_o


# --------------------------------- main --------------------------------------


if __name__ == "__main__":
    N, C, T = 2, 32, 64          # batch, channels, sequence length
    K, dilation = 3, 2           # kernel_size, dilation
    pad = dilation * (K - 1) // 2
    shift = 1

    key = jax.random.PRNGKey(0)
    ks = jax.random.split(key, 20)

    def bn_params(k0, k1, k2, k3):
        gamma = 1.0 + 0.1 * jax.random.normal(k0, (C,), jnp.float32)
        beta = 0.1 * jax.random.normal(k1, (C,), jnp.float32)
        mean = 0.1 * jax.random.normal(k2, (C,), jnp.float32)
        var = jax.random.uniform(k3, (C,), jnp.float32, 0.5, 1.5)
        return (gamma, beta, mean, var)

    params = {
        "dilation": dilation,
        "w_pos": 0.1 * jax.random.normal(ks[0], (C, C, K), jnp.float32),
        "w_x": 0.1 * jax.random.normal(ks[1], (C, C, K), jnp.float32),
        "w_cnf": 0.1 * jax.random.normal(ks[2], (C, C, K), jnp.float32),
        "w_feat": 0.1 * jax.random.normal(ks[3], (C, C, 1), jnp.float32),
        "bn_pos": bn_params(ks[4], ks[5], ks[6], ks[7]),
        "bn_fus": bn_params(ks[8], ks[9], ks[10], ks[11]),
        "bn_feat": bn_params(ks[12], ks[13], ks[14], ks[15]),
    }

    x = jax.random.normal(ks[16], (N, C, T), jnp.float32)
    cnf = jax.nn.sigmoid(jax.random.normal(ks[17], (N, C, T), jnp.float32))

    out, cnf_o = conf_conv_block_input_fusion(x, cnf, params, pad, shift)
    out, cnf_o = jax.block_until_ready((out, cnf_o))

    ref_out, ref_cnf_o = reference(x, cnf, params, pad, shift)
    assert out.shape == ref_out.shape and cnf_o.shape == ref_cnf_o.shape
    # Matmul operands, weights and the residual path are bf16 (f32 accumulate);
    # tolerance reflects bf16 operand/residual rounding vs the pure-f32 ref.
    assert jnp.allclose(out, ref_out, atol=3e-2, rtol=2e-2)
    assert jnp.allclose(cnf_o, ref_cnf_o, atol=2e-2, rtol=2e-2)

    print("KERNEL_OK")
</pallas_src>

<mosaic_0001>
module attributes {stable_mosaic.version = 11 : i64} {
  func.func @conf_block_kernel(%arg0: i32, %arg1: i32, %arg2: memref<1x32x132xbf16, #tpu.memory_space<vmem>>, %arg3: memref<1x32x132xbf16, #tpu.memory_space<vmem>>, %arg4: memref<32x192xbf16, #tpu.memory_space<vmem>>, %arg5: memref<32x96xbf16, #tpu.memory_space<vmem>>, %arg6: memref<32x32xbf16, #tpu.memory_space<vmem>>, %arg7: memref<32x3xf32, #tpu.memory_space<vmem>>, %arg8: memref<1x32x128xf32, #tpu.memory_space<vmem>>, %arg9: memref<1x32x128xf32, #tpu.memory_space<vmem>>) attributes {dimension_semantics = [#tpu.dimension_semantics<parallel>, #tpu.dimension_semantics<parallel>], iteration_bounds = array<i64: 2, 1>, scalar_prefetch = 0 : i64, scratch_operands = 0 : i64, tpu.core_type = #tpu.core_type<tc>, window_params = [{transform_indices = @transform_0, window_bounds = array<i64: 1, 32, 132>}, {transform_indices = @transform_1, window_bounds = array<i64: 1, 32, 132>}, {pipeline_mode = #tpu.pipeline_mode<synchronous>, transform_indices = @transform_2, window_bounds = array<i64: 32, 192>}, {pipeline_mode = #tpu.pipeline_mode<synchronous>, transform_indices = @transform_3, window_bounds = array<i64: 32, 96>}, {pipeline_mode = #tpu.pipeline_mode<synchronous>, transform_indices = @transform_4, window_bounds = array<i64: 32, 32>}, {pipeline_mode = #tpu.pipeline_mode<synchronous>, transform_indices = @transform_5, window_bounds = array<i64: 32, 3>}, {transform_indices = @transform_6, window_bounds = array<i64: 1, 32, 128>}, {transform_indices = @transform_7, window_bounds = array<i64: 1, 32, 128>}]} {
    %c128_i32 = arith.constant 128 : i32
    %0 = arith.muli %arg1, %c128_i32 : i32
    %1 = tpu.assume_multiple %0, 128 : i32
    %c0 = arith.constant 0 : index
    %c0_0 = arith.constant 0 : index
    %2 = arith.index_cast %1 : i32 to index
    %3 = vector.load %arg2[%c0, %c0_0, %2] : memref<1x32x132xbf16, #tpu.memory_space<vmem>>, vector<1x32x132xbf16>
    %4 = vector.shape_cast %3 : vector<1x32x132xbf16> to vector<32x132xbf16>
    %c0_1 = arith.constant 0 : index
    %c0_2 = arith.constant 0 : index
    %5 = arith.index_cast %1 : i32 to index
    %6 = vector.load %arg3[%c0_1, %c0_2, %5] : memref<1x32x132xbf16, #tpu.memory_space<vmem>>, vector<1x32x132xbf16>
    %7 = vector.shape_cast %6 : vector<1x32x132xbf16> to vector<32x132xbf16>
    %c0_3 = arith.constant 0 : index
    %c0_4 = arith.constant 0 : index
    %8 = vector.load %arg7[%c0_3, %c0_4] : memref<32x3xf32, #tpu.memory_space<vmem>>, vector<32x1xf32>
    %c0_5 = arith.constant 0 : index
    %c1 = arith.constant 1 : index
    %9 = vector.load %arg7[%c0_5, %c1] : memref<32x3xf32, #tpu.memory_space<vmem>>, vector<32x1xf32>
    %c0_6 = arith.constant 0 : index
    %c2 = arith.constant 2 : index
    %10 = vector.load %arg7[%c0_6, %c2] : memref<32x3xf32, #tpu.memory_space<vmem>>, vector<32x1xf32>
    %11 = vector.extract_strided_slice %4 {offsets = [0, 0], sizes = [32, 128], strides = [1, 1]} : vector<32x132xbf16> to vector<32x128xbf16>
    %12 = vector.extract_strided_slice %7 {offsets = [0, 0], sizes = [32, 128], strides = [1, 1]} : vector<32x132xbf16> to vector<32x128xbf16>
    %13 = vector.extract_strided_slice %4 {offsets = [0, 2], sizes = [32, 128], strides = [1, 1]} : vector<32x132xbf16> to vector<32x128xbf16>
    %14 = vector.extract_strided_slice %7 {offsets = [0, 2], sizes = [32, 128], strides = [1, 1]} : vector<32x132xbf16> to vector<32x128xbf16>
    %15 = vector.extract_strided_slice %4 {offsets = [0, 4], sizes = [32, 128], strides = [1, 1]} : vector<32x132xbf16> to vector<32x128xbf16>
    %16 = vector.extract_strided_slice %7 {offsets = [0, 4], sizes = [32, 128], strides = [1, 1]} : vector<32x132xbf16> to vector<32x128xbf16>
    %17 = tpu.concatenate %11, %12, %13, %14, %15, %16 in 0 : vector<32x128xbf16>, vector<32x128xbf16>, vector<32x128xbf16>, vector<32x128xbf16>, vector<32x128xbf16>, vector<32x128xbf16> -> vector<192x128xbf16>
    %c0_7 = arith.constant 0 : index
    %c0_8 = arith.constant 0 : index
    %18 = vector.load %arg4[%c0_7, %c0_8] : memref<32x192xbf16, #tpu.memory_space<vmem>>, vector<32x192xbf16>
    %cst = arith.constant dense<0.000000e+00> : vector<32x128xf32>
    %19 = tpu.matmul %18, %17, %cst {dimension_numbers = #tpu.dot_dimension_numbers<[1], [0], [0], [1], [0, 0, 1, 1], [], []>} : vector<32x192xbf16>, vector<192x128xbf16>, vector<32x128xf32> -> vector<32x128xf32>
    %20 = vector.broadcast %8 : vector<32x1xf32> to vector<32x128xf32>
    %21 = arith.addf %19, %20 : vector<32x128xf32>
    %22 = arith.negf %21 : vector<32x128xf32>
    %23 = math.exp %22 : vector<32x128xf32>
    %cst_9 = arith.constant 1.000000e+00 : f32
    %24 = vector.broadcast %cst_9 : f32 to vector<32x128xf32>
    %25 = arith.addf %24, %23 : vector<32x128xf32>
    %26 = arith.divf %24, %25 : vector<32x128xf32>
    %c0_10 = arith.constant 0 : index
    %c0_11 = arith.constant 0 : index
    %c0_12 = arith.constant 0 : index
    %27 = vector.load %arg9[%c0_10, %c0_11, %c0_12] : memref<1x32x128xf32, #tpu.memory_space<vmem>>, vector<1x32x128xf32>
    %28 = vector.shape_cast %27 : vector<1x32x128xf32> to vector<32x128xf32>
    %29 = vector.shape_cast %26 : vector<32x128xf32> to vector<1x32x128xf32>
    tpu.vector_store %arg9[%c0_10, %c0_11, %c0_12], %29 {strides = array<i32>} : memref<1x32x128xf32, #tpu.memory_space<vmem>>, vector<1x32x128xf32>,
    %cst_13 = arith.constant 1.000000e+00 : bf16
    %30 = vector.broadcast %cst_13 : bf16 to vector<32x132xbf16>
    %31 = arith.addf %30, %7 : vector<32x132xbf16>
    %32 = arith.mulf %4, %31 : vector<32x132xbf16>
    %33 = vector.extract_strided_slice %32 {offsets = [0, 0], sizes = [32, 128], strides = [1, 1]} : vector<32x132xbf16> to vector<32x128xbf16>
    %34 = vector.extract_strided_slice %32 {offsets = [0, 2], sizes = [32, 128], strides = [1, 1]} : vector<32x132xbf16> to vector<32x128xbf16>
    %35 = vector.extract_strided_slice %32 {offsets = [0, 4], sizes = [32, 128], strides = [1, 1]} : vector<32x132xbf16> to vector<32x128xbf16>
    %36 = tpu.concatenate %33, %34, %35 in 0 : vector<32x128xbf16>, vector<32x128xbf16>, vector<32x128xbf16> -> vector<96x128xbf16>
    %c0_14 = arith.constant 0 : index
    %c0_15 = arith.constant 0 : index
    %37 = vector.load %arg5[%c0_14, %c0_15] : memref<32x96xbf16, #tpu.memory_space<vmem>>, vector<32x96xbf16>
    %cst_16 = arith.constant dense<0.000000e+00> : vector<32x128xf32>
    %38 = tpu.matmul %37, %36, %cst_16 {dimension_numbers = #tpu.dot_dimension_numbers<[1], [0], [0], [1], [0, 0, 1, 1], [], []>} : vector<32x96xbf16>, vector<96x128xbf16>, vector<32x128xf32> -> vector<32x128xf32>
    %39 = vector.broadcast %9 : vector<32x1xf32> to vector<32x128xf32>
    %40 = arith.addf %38, %39 : vector<32x128xf32>
    %cst_17 = arith.constant 0.000000e+00 : f32
    %41 = vector.broadcast %cst_17 : f32 to vector<32x128xf32>
    %42 = arith.maximumf %40, %41 : vector<32x128xf32>
    %c0_18 = arith.constant 0 : index
    %c0_19 = arith.constant 0 : index
    %43 = vector.load %arg6[%c0_18, %c0_19] : memref<32x32xbf16, #tpu.memory_space<vmem>>, vector<32x32xbf16>
    %44 = arith.truncf %42 : vector<32x128xf32> to vector<32x128xbf16>
    %cst_20 = arith.constant dense<0.000000e+00> : vector<32x128xf32>
    %45 = tpu.matmul %43, %44, %cst_20 {dimension_numbers = #tpu.dot_dimension_numbers<[1], [0], [0], [1], [0, 0, 1, 1], [], []>} : vector<32x32xbf16>, vector<32x128xbf16>, vector<32x128xf32> -> vector<32x128xf32>
    %46 = vector.broadcast %10 : vector<32x1xf32> to vector<32x128xf32>
    %47 = arith.addf %45, %46 : vector<32x128xf32>
    %48 = vector.extract_strided_slice %4 {offsets = [0, 3], sizes = [32, 128], strides = [1, 1]} : vector<32x132xbf16> to vector<32x128xbf16>
    %49 = arith.extf %48 : vector<32x128xbf16> to vector<32x128xf32>
    %cst_21 = arith.constant 0.000000e+00 : f32
    %50 = vector.broadcast %cst_21 : f32 to vector<32x128xf32>
    %51 = arith.maximumf %47, %50 : vector<32x128xf32>
    %52 = arith.addf %49, %51 : vector<32x128xf32>
    %c0_22 = arith.constant 0 : index
    %c0_23 = arith.constant 0 : index
    %c0_24 = arith.constant 0 : index
    %53 = vector.load %arg8[%c0_22, %c0_23, %c0_24] : memref<1x32x128xf32, #tpu.memory_space<vmem>>, vector<1x32x128xf32>
    %54 = vector.shape_cast %53 : vector<1x32x128xf32> to vector<32x128xf32>
    %55 = vector.shape_cast %52 : vector<32x128xf32> to vector<1x32x128xf32>
    tpu.vector_store %arg8[%c0_22, %c0_23, %c0_24], %55 {strides = array<i32>} : memref<1x32x128xf32, #tpu.memory_space<vmem>>, vector<1x32x128xf32>,
    return
  }
  func.func @transform_0(%arg0: i32, %arg1: i32) -> (i32, i32, i32) {
    %c0_i32 = arith.constant 0 : i32
    %c0_i32_0 = arith.constant 0 : i32
    %c0_i32_1 = arith.constant 0 : i32
    return %arg0, %c0_i32, %c0_i32_0 : i32, i32, i32
  }
  func.func @transform_1(%arg0: i32, %arg1: i32) -> (i32, i32, i32) {
    %c0_i32 = arith.constant 0 : i32
    %c0_i32_0 = arith.constant 0 : i32
    %c0_i32_1 = arith.constant 0 : i32
    return %arg0, %c0_i32, %c0_i32_0 : i32, i32, i32
  }
  func.func @transform_2(%arg0: i32, %arg1: i32) -> (i32, i32) {
    %c0_i32 = arith.constant 0 : i32
    %c0_i32_0 = arith.constant 0 : i32
    %c0_i32_1 = arith.constant 0 : i32
    return %c0_i32, %c0_i32_0 : i32, i32
  }
  func.func @transform_3(%arg0: i32, %arg1: i32) -> (i32, i32) {
    %c0_i32 = arith.constant 0 : i32
    %c0_i32_0 = arith.constant 0 : i32
    %c0_i32_1 = arith.constant 0 : i32
    return %c0_i32, %c0_i32_0 : i32, i32
  }
  func.func @transform_4(%arg0: i32, %arg1: i32) -> (i32, i32) {
    %c0_i32 = arith.constant 0 : i32
    %c0_i32_0 = arith.constant 0 : i32
    %c0_i32_1 = arith.constant 0 : i32
    return %c0_i32, %c0_i32_0 : i32, i32
  }
  func.func @transform_5(%arg0: i32, %arg1: i32) -> (i32, i32) {
    %c0_i32 = arith.constant 0 : i32
    %c0_i32_0 = arith.constant 0 : i32
    %c0_i32_1 = arith.constant 0 : i32
    return %c0_i32, %c0_i32_0 : i32, i32
  }
  func.func @transform_6(%arg0: i32, %arg1: i32) -> (i32, i32, i32) {
    %c0_i32 = arith.constant 0 : i32
    %c0_i32_0 = arith.constant 0 : i32
    return %arg0, %c0_i32, %arg1 : i32, i32, i32
  }
  func.func @transform_7(%arg0: i32, %arg1: i32) -> (i32, i32, i32) {
    %c0_i32 = arith.constant 0 : i32
    %c0_i32_0 = arith.constant 0 : i32
    return %arg0, %c0_i32, %arg1 : i32, i32, i32
  }
}

</mosaic_0001>

<llo_original>
// kernel: tpu_custom_call.1
$region0: #{tpu_custom_call.1}
  #allocation0 [shape = 'u32[]', space=smem, size = 0x4, offset = 0x4, fixed_abs, tag = 'smem constant byte address 0x4 - core index']
  #allocation1 [shape = 'u32[144,128]{1,0:T(1,128)}', space=vmem, size = 0x12000, scoped, tag = 'internal scratch']
  %s0 = inlined_call_operand.hbm [shape: bf16[2,32,132], index: 0, kind: input, shape index: {}]
  %s1 = inlined_call_operand.hbm [shape: bf16[2,32,132], index: 1, kind: input, shape index: {}]
  %s2 = inlined_call_operand.vmem [shape: bf16[32,192], index: 2, kind: input, shape index: {}]
  %s3 = inlined_call_operand.hbm [shape: bf16[32,96], index: 3, kind: input, shape index: {}]
  %s4 = inlined_call_operand.vmem [shape: bf16[32,32], index: 4, kind: input, shape index: {}]
  %s5 = inlined_call_operand.vmem [shape: f32[32,3], index: 5, kind: input, shape index: {}]
  %s6 = inlined_call_operand.hbm [shape: f32[2,32,128], index: 6, kind: output, shape index: {0}]
  %s7 = inlined_call_operand.hbm [shape: f32[2,32,128], index: 7, kind: output, shape index: {1}]
  %8 = xla_tuple %s6, %s7
  %s9 = sld [smem:[#allocation0]]
  $region77: #{tpu_custom_call.1} parent=0
    _
  %s11 = ssub.s32 1, %s9
  %s12 = scalar_select 0, %s11, %s9
  $region1: #{tpu_custom_call.1} parent=0
    #allocation2 [shape = 'u8[32768]{0}', space=vmem, size = 0x8000, scoped, tag = 'input window, operand 0']
    #allocation3 [shape = 's32[2]{0}', space=sflag, size = 0x8, scoped, tag = 'scoped memory for tpu_custom_call.1']
    #allocation4 [shape = 's32[2]{0}', space=sflag, size = 0x8, scoped, tag = 'scoped memory for tpu_custom_call.1']
    #allocation5 [shape = 'u8[32768]{0}', space=vmem, size = 0x8000, scoped, tag = 'input window, operand 1']
    #allocation6 [shape = 's32[2]{0}', space=sflag, size = 0x8, scoped, tag = 'scoped memory for tpu_custom_call.1']
    #allocation7 [shape = 'u8[8192]{0}', space=vmem, size = 0x2000, scoped, tag = 'input window, operand 3, single buffered']
    #allocation8 [shape = 'u8[32768]{0}', space=vmem, size = 0x8000, scoped, tag = 'output window, operand 0']
    #allocation9 [shape = 'u8[32768]{0}', space=vmem, size = 0x8000, scoped, tag = 'output window, operand 1']
    #allocation10 [shape = 's32[2]{0}', space=sflag, size = 0x8, scoped, tag = 'scoped memory for tpu_custom_call.1']
    %13 = vsyncpa [#allocation3], 0
    %s14 = scalar_lea.sflag [#allocation3], 1
    %15 = vsyncpa %s14, 0
    %16 = vsyncpa [#allocation6], 0
    %s17 = scalar_lea.sflag [#allocation6], 1
    %18 = vsyncpa %s17, 0
    %19 = vsyncpa [#allocation4], 0
    %s20 = scalar_lea.sflag [#allocation4], 1
    %21 = vsyncpa %s20, 0
    %22 = vsyncpa [#allocation10], 0
    %s23 = scalar_lea.sflag [#allocation10], 1
    %24 = vsyncpa %s23, 0
    loop: start=0, step=1, limit=4
    $region2: #{tpu_custom_call.1} parent=1 // loop_pre_header
      _
    $region3: #{tpu_custom_call.1} parent=1 // loop_header
      %s26 = sphi 0, %s30
      %p27 = scmp.ge.s32.totalorder %s26, 4
      %s33 = sphi 0, %s45
      %s34 = sphi 0, %s41
      %s35 = sphi 0, %s33
      %s36 = sphi 0, %s34
      %s37 = sphi 0, %s35
      %s38 = sphi 0, %s36
      %s48 = sphi 0, %s50
      %s51 = sphi 0, %s48
      %s52 = sphi 0, %s51
      %s68 = sphi 0, %s52
      %s74 = sphi 0, %s76
      %s77 = sphi 0, %s74
      %s78 = sphi 0, %s77
      %s94 = sphi 0, %s78
      %s98 = sphi 0, %s98
      %s100 = sphi 0, %s98
      %s101 = sphi 0, %s100
      %s115 = sphi 0, %s101
      %s119 = sphi 0, %s119
      %s121 = sphi 0, %s119
      %s122 = sphi 0, %s121
      %s136 = sphi 0, %s122
      %s140 = sphi 0, %s140
      %s142 = sphi 0, %s140
      %s143 = sphi 0, %s142
      %s157 = sphi 0, %s143
      %s161 = sphi 0, %s161
      %s163 = sphi 0, %s161
      %s164 = sphi 0, %s163
      %s178 = sphi 0, %s164
      %s186 = sphi 0, %s188
      %s189 = sphi 0, %s186
      %s190 = sphi 0, %s189
      %s206 = sphi 0, %s190
      %s214 = sphi 0, %s216
      %s217 = sphi 0, %s214
      %s218 = sphi 0, %s217
      %s234 = sphi 0, %s218
    $region4: #{tpu_custom_call.1} parent=1 // loop_header_branch
      %29 = sbr.rel (%p27) target = $region8
    $region5: #{tpu_custom_call.1} parent=1 // loop_body
      %s31 = ssub.s32 %s26, 1
      %s32 = ssub.s32 %s26, 2
      %s39 = sadd.s32 1, %s34
      %p40 = scmp.ge.s32.totalorder %s39, 1
      %s41 = scalar_select %p40, 0, %s39
      %s42 = sadd.s32 1, %s33
      %s43 = scalar_select %p40, %s42, %s33
      %p44 = scmp.ge.s32.totalorder %s43, 2
      %s45 = scalar_select %p44, 0, %s43
      %s46 = ssub.s32 %s33, %s45
      %p47 = scmp.eq.s32.totalorder %s46, 0
      %s49 = sadd.s32 %s48, 1
      %s50 = scalar_select %p47, %s48, %s49
      %p53 = pneg %p47
      %p54 = scmp.eq.s32.totalorder %s26, 1
      %p55 = por %p53, %p54
      %p56 = scmp.ne.s32.totalorder %s48, %s51
      %p57 = scmp.eq.s32.totalorder %s26, 0
      %p58 = por %p56, %p57
      %p59 = scmp.ne.s32.totalorder %s48, %s51
      %p60 = scmp.eq.s32.totalorder %s31, 1
      %p61 = por %p59, %p60
      %p62 = scmp.ne.s32.totalorder %s51, %s52
      %p63 = scmp.eq.s32.totalorder %s31, 0
      %p64 = por %p62, %p63
      %p65 = scmp.ne.s32.totalorder %s51, %s52
      %p66 = scmp.eq.s32.totalorder %s32, 1
      %p67 = por %p65, %p66
      %p69 = scmp.ne.s32.totalorder %s52, %s68
      %p70 = scmp.eq.s32.totalorder %s32, 0
      %p71 = por %p69, %p70
      %s72 = ssub.s32 %s33, %s45
      %p73 = scmp.eq.s32.totalorder %s72, 0
      %s75 = sadd.s32 %s74, 1
      %s76 = scalar_select %p73, %s74, %s75
      %p79 = pneg %p73
      %p80 = scmp.eq.s32.totalorder %s26, 1
      %p81 = por %p79, %p80
      %p82 = scmp.ne.s32.totalorder %s74, %s77
      %p83 = scmp.eq.s32.totalorder %s26, 0
      %p84 = por %p82, %p83
      %p85 = scmp.ne.s32.totalorder %s74, %s77
      %p86 = scmp.eq.s32.totalorder %s31, 1
      %p87 = por %p85, %p86
      %p88 = scmp.ne.s32.totalorder %s77, %s78
      %p89 = scmp.eq.s32.totalorder %s31, 0
      %p90 = por %p88, %p89
      %p91 = scmp.ne.s32.totalorder %s77, %s78
      %p92 = scmp.eq.s32.totalorder %s32, 1
      %p93 = por %p91, %p92
      %p95 = scmp.ne.s32.totalorder %s78, %s94
      %p96 = scmp.eq.s32.totalorder %s32, 0
      %p97 = por %p95, %p96
      %s99 = sadd.s32 %s98, 1
      %p102 = scmp.eq.s32.totalorder %s26, 1
      %p103 = scmp.ne.s32.totalorder %s98, %s100
      %p104 = scmp.eq.s32.totalorder %s26, 0
      %p105 = por %p103, %p104
      %p106 = scmp.ne.s32.totalorder %s98, %s100
      %p107 = scmp.eq.s32.totalorder %s31, 1
      %p108 = por %p106, %p107
      %p109 = scmp.ne.s32.totalorder %s100, %s101
      %p110 = scmp.eq.s32.totalorder %s31, 0
      %p111 = por %p109, %p110
      %p112 = scmp.ne.s32.totalorder %s100, %s101
      %p113 = scmp.eq.s32.totalorder %s32, 1
      %p114 = por %p112, %p113
      %p116 = scmp.ne.s32.totalorder %s101, %s115
      %p117 = scmp.eq.s32.totalorder %s32, 0
      %p118 = por %p116, %p117
      %s120 = sadd.s32 %s119, 1
      %p123 = scmp.eq.s32.totalorder %s26, 1
      %p124 = scmp.ne.s32.totalorder %s119, %s121
      %p125 = scmp.eq.s32.totalorder %s26, 0
      %p126 = por %p124, %p125
      %p127 = scmp.ne.s32.totalorder %s119, %s121
      %p128 = scmp.eq.s32.totalorder %s31, 1
      %p129 = por %p127, %p128
      %p130 = scmp.ne.s32.totalorder %s121, %s122
      %p131 = scmp.eq.s32.totalorder %s31, 0
      %p132 = por %p130, %p131
      %p133 = scmp.ne.s32.totalorder %s121, %s122
      %p134 = scmp.eq.s32.totalorder %s32, 1
      %p135 = por %p133, %p134
      %p137 = scmp.ne.s32.totalorder %s122, %s136
      %p138 = scmp.eq.s32.totalorder %s32, 0
      %p139 = por %p137, %p138
      %s141 = sadd.s32 %s140, 1
      %p144 = scmp.eq.s32.totalorder %s26, 1
      %p145 = scmp.ne.s32.totalorder %s140, %s142
      %p146 = scmp.eq.s32.totalorder %s26, 0
      %p147 = por %p145, %p146
      %p148 = scmp.ne.s32.totalorder %s140, %s142
      %p149 = scmp.eq.s32.totalorder %s31, 1
      %p150 = por %p148, %p149
      %p151 = scmp.ne.s32.totalorder %s142, %s143
      %p152 = scmp.eq.s32.totalorder %s31, 0
      %p153 = por %p151, %p152
      %p154 = scmp.ne.s32.totalorder %s142, %s143
      %p155 = scmp.eq.s32.totalorder %s32, 1
      %p156 = por %p154, %p155
      %p158 = scmp.ne.s32.totalorder %s143, %s157
      %p159 = scmp.eq.s32.totalorder %s32, 0
      %p160 = por %p158, %p159
      %s162 = sadd.s32 %s161, 1
      %p165 = scmp.eq.s32.totalorder %s26, 1
      %p166 = scmp.ne.s32.totalorder %s161, %s163
      %p167 = scmp.eq.s32.totalorder %s26, 0
      %p168 = por %p166, %p167
      %p169 = scmp.ne.s32.totalorder %s161, %s163
      %p170 = scmp.eq.s32.totalorder %s31, 1
      %p171 = por %p169, %p170
      %p172 = scmp.ne.s32.totalorder %s163, %s164
      %p173 = scmp.eq.s32.totalorder %s31, 0
      %p174 = por %p172, %p173
      %p175 = scmp.ne.s32.totalorder %s163, %s164
      %p176 = scmp.eq.s32.totalorder %s32, 1
      %p177 = por %p175, %p176
      %p179 = scmp.ne.s32.totalorder %s164, %s178
      %p180 = scmp.eq.s32.totalorder %s32, 0
      %p181 = por %p179, %p180
      %s182 = ssub.s32 %s33, %s45
      %s183 = ssub.s32 %s34, %s41
      %s184 = sor.u32 %s182, %s183
      %p185 = scmp.eq.s32.totalorder %s184, 0
      %s187 = sadd.s32 %s186, 1
      %s188 = scalar_select %p185, %s186, %s187
      %p191 = pneg %p185
      %p192 = scmp.eq.s32.totalorder %s26, 1
      %p193 = por %p191, %p192
      %p194 = scmp.ne.s32.totalorder %s186, %s189
      %p195 = scmp.eq.s32.totalorder %s26, 0
      %p196 = por %p194, %p195
      %p197 = scmp.ne.s32.totalorder %s186, %s189
      %p198 = scmp.eq.s32.totalorder %s31, 1
      %p199 = por %p197, %p198
      %p200 = scmp.ne.s32.totalorder %s189, %s190
      %p201 = scmp.eq.s32.totalorder %s31, 0
      %p202 = por %p200, %p201
      %p203 = scmp.ne.s32.totalorder %s189, %s190
      %p204 = scmp.eq.s32.totalorder %s32, 1
      %p205 = por %p203, %p204
      %p207 = scmp.ne.s32.totalorder %s190, %s206
      %p208 = scmp.eq.s32.totalorder %s32, 0
      %p209 = por %p207, %p208
      %s210 = ssub.s32 %s33, %s45
      %s211 = ssub.s32 %s34, %s41
      %s212 = sor.u32 %s210, %s211
      %p213 = scmp.eq.s32.totalorder %s212, 0
      %s215 = sadd.s32 %s214, 1
      %s216 = scalar_select %p213, %s214, %s215
      %p219 = pneg %p213
      %p220 = scmp.eq.s32.totalorder %s26, 1
      %p221 = por %p219, %p220
      %p222 = scmp.ne.s32.totalorder %s214, %s217
      %p223 = scmp.eq.s32.totalorder %s26, 0
      %p224 = por %p222, %p223
      %p225 = scmp.ne.s32.totalorder %s214, %s217
      %p226 = scmp.eq.s32.totalorder %s31, 1
      %p227 = por %p225, %p226
      %p228 = scmp.ne.s32.totalorder %s217, %s218
      %p229 = scmp.eq.s32.totalorder %s31, 0
      %p230 = por %p228, %p229
      %p231 = scmp.ne.s32.totalorder %s217, %s218
      %p232 = scmp.eq.s32.totalorder %s32, 1
      %p233 = por %p231, %p232
      %p235 = scmp.ne.s32.totalorder %s218, %s234
      %p236 = scmp.eq.s32.totalorder %s32, 0
      %p237 = por %p235, %p236
      %p238 = scmp.le.s32.totalorder 1, %s26
      %p239 = scmp.lt.s32.totalorder %s26, 3
      %p240 = pnand %p238, %p239
      %p241 = pneg %p240
      // Predicated region
      $region9: #{tpu_custom_call.1} parent=5 // pred_check
        _
      $region10: #{tpu_custom_call.1} parent=5 // pred_check_branch
        %243 = sbr.rel (%p240) target = $region12
      $region11: #{tpu_custom_call.1} parent=5 // pred_region
        %s244 = ssub.s32 %s26, 1
        // Predicated region
        $region13: #{tpu_custom_call.1} parent=11 // pred_check
          %p245 = pneg %p111
        $region14: #{tpu_custom_call.1} parent=11 // pred_check_branch
          %247 = sbr.rel (%p245) target = $region16
        $region15: #{tpu_custom_call.1} parent=11 // pred_region
          _
        $region16: #{tpu_custom_call.1} parent=11 // pred_fallthru
          _
        // Predicated region
        $region17: #{tpu_custom_call.1} parent=11 // pred_check
          %p248 = pneg %p132
        $region18: #{tpu_custom_call.1} parent=11 // pred_check_branch
          %250 = sbr.rel (%p248) target = $region20
        $region19: #{tpu_custom_call.1} parent=11 // pred_region
          %s252 = ssub.s32 256, 256
          %253 = vsyncadd [#allocation6], %s252
          %s254 = sshll.u32 [#allocation7], 4
          %s255 = int_to_ptr.vmem [resolvable:$true] %s254
          %260 = dma.hbm_to_vmem [thread:$0]  %s3, 256, %s255, [#allocation6], 64, 64, 4
        $region20: #{tpu_custom_call.1} parent=11 // pred_fallthru
          _
        // Predicated region
        $region21: #{tpu_custom_call.1} parent=11 // pred_check
          %p261 = pneg %p153
        $region22: #{tpu_custom_call.1} parent=11 // pred_check_branch
          %263 = sbr.rel (%p261) target = $region24
        $region23: #{tpu_custom_call.1} parent=11 // pred_region
          _
        $region24: #{tpu_custom_call.1} parent=11 // pred_fallthru
          _
        // Predicated region
        $region25: #{tpu_custom_call.1} parent=11 // pred_check
          %p264 = pneg %p174
        $region26: #{tpu_custom_call.1} parent=11 // pred_check_branch
          %266 = sbr.rel (%p264) target = $region28
        $region27: #{tpu_custom_call.1} parent=11 // pred_region
          _
        $region28: #{tpu_custom_call.1} parent=11 // pred_fallthru
          _
      $region12: #{tpu_custom_call.1} parent=5 // pred_fallthru
        _
      %p267 = scmp.lt.s32.totalorder %s26, 2
      // Predicated region
      $region29: #{tpu_custom_call.1} parent=5 // pred_check
        %p268 = pneg %p267
      $region30: #{tpu_custom_call.1} parent=5 // pred_check_branch
        %270 = sbr.rel (%p268) target = $region32
      $region31: #{tpu_custom_call.1} parent=5 // pred_region
        // Predicated region
        $region33: #{tpu_custom_call.1} parent=31 // pred_check
          %p271 = pneg %p58
        $region34: #{tpu_custom_call.1} parent=31 // pred_check_branch
          %273 = sbr.rel (%p271) target = $region36
        $region35: #{tpu_custom_call.1} parent=31 // pred_region
          %s274 = sand.u32 %s48, 1
          %s275 = scalar_lea.sflag [#allocation3], %s274
          %s276 = sand.u32 %s48, 1
          %s277 = smul.addr %s276, 32
          %s278 = scalar_lea.vmem [#allocation2], %s277
          %s280 = ssub.s32 512, 512
          %281 = vsyncadd %s275, %s280
          %s282 = smul.addr %s33, 8
          %s283 = smul.addr %s282, 64
          %s284 = scalar_lea.hbm %s0, %s283
          %s285 = sshll.u32 %s278, 4
          %s286 = int_to_ptr.vmem [resolvable:$true] %s285
          %291 = dma.hbm_to_vmem [thread:$0]  %s284, 512, %s286, %s275, 128, 128, 8
        $region36: #{tpu_custom_call.1} parent=31 // pred_fallthru
          _
        // Predicated region
        $region37: #{tpu_custom_call.1} parent=31 // pred_check
          %p292 = pneg %p84
        $region38: #{tpu_custom_call.1} parent=31 // pred_check_branch
          %294 = sbr.rel (%p292) target = $region40
        $region39: #{tpu_custom_call.1} parent=31 // pred_region
          %s295 = sand.u32 %s26, 1
          %s296 = scalar_lea.sflag [#allocation6], %s295
          %s297 = sand.u32 %s74, 1
          %s298 = smul.addr %s297, 32
          %s299 = scalar_lea.vmem [#allocation5], %s298
          %s301 = ssub.s32 512, 512
          %302 = vsyncadd %s296, %s301
          %s303 = smul.addr %s33, 8
          %s304 = smul.addr %s303, 64
          %s305 = scalar_lea.hbm %s1, %s304
          %s306 = sshll.u32 %s299, 4
          %s307 = int_to_ptr.vmem [resolvable:$true] %s306
          %312 = dma.hbm_to_vmem [thread:$0]  %s305, 512, %s307, %s296, 128, 128, 8
        $region40: #{tpu_custom_call.1} parent=31 // pred_fallthru
          _
      $region32: #{tpu_custom_call.1} parent=5 // pred_fallthru
        _
      %p313 = scmp.le.s32.totalorder 1, %s26
      %p314 = scmp.lt.s32.totalorder %s26, 3
      %p315 = pnand %p313, %p314
      %p316 = pneg %p315
      // Predicated region
      $region41: #{tpu_custom_call.1} parent=5 // pred_check
        _
      $region42: #{tpu_custom_call.1} parent=5 // pred_check_branch
        %318 = sbr.rel (%p315) target = $region44
      $region43: #{tpu_custom_call.1} parent=5 // pred_region
        %s319 = ssub.s32 %s26, 1
        %s320 = sand.u32 %s51, 1
        %s321 = scalar_lea.sflag [#allocation3], %s320
        %s322 = sand.u32 %s51, 1
        %s323 = smul.addr %s322, 32
        %s324 = scalar_lea.vmem [#allocation2], %s323
        // Predicated region
        $region45: #{tpu_custom_call.1} parent=43 // pred_check
          %p325 = pneg %p64
        $region46: #{tpu_custom_call.1} parent=43 // pred_check_branch
          %327 = sbr.rel (%p325) target = $region48
        $region47: #{tpu_custom_call.1} parent=43 // pred_region
          %328 = dma.done %s321, 512
        $region48: #{tpu_custom_call.1} parent=43 // pred_fallthru
          _
        %s329 = sand.u32 %s31, 1
        %s330 = scalar_lea.sflag [#allocation6], %s329
        %s331 = sand.u32 %s77, 1
        %s332 = smul.addr %s331, 32
        %s333 = scalar_lea.vmem [#allocation5], %s332
        // Predicated region
        $region49: #{tpu_custom_call.1} parent=43 // pred_check
          %p334 = pneg %p90
        $region50: #{tpu_custom_call.1} parent=43 // pred_check_branch
          %336 = sbr.rel (%p334) target = $region52
        $region51: #{tpu_custom_call.1} parent=43 // pred_region
          %337 = dma.done %s330, 512
        $region52: #{tpu_custom_call.1} parent=43 // pred_fallthru
          _
        // Predicated region
        $region53: #{tpu_custom_call.1} parent=43 // pred_check
          %p338 = pneg %p132
        $region54: #{tpu_custom_call.1} parent=43 // pred_check_branch
          %340 = sbr.rel (%p338) target = $region56
        $region55: #{tpu_custom_call.1} parent=43 // pred_region
          %341 = dma.done [#allocation6], 256
        $region56: #{tpu_custom_call.1} parent=43 // pred_fallthru
          _
        %s342 = sand.u32 %s51, 1
        %s343 = scalar_lea.sflag [#allocation3], %s342
        %s344 = sand.u32 %s51, 1
        %s345 = smul.addr %s344, 32
        %s346 = scalar_lea.vmem [#allocation2], %s345
        %p347 = pneg %p64
        %p348 = pneg %p61
        %s349 = sand.u32 %s31, 1
        %s350 = scalar_lea.sflag [#allocation6], %s349
        %s351 = sand.u32 %s77, 1
        %s352 = smul.addr %s351, 32
        %s353 = scalar_lea.vmem [#allocation5], %s352
        %p354 = pneg %p90
        %p355 = pneg %p87
        %p356 = pneg %p111
        %p357 = pneg %p108
        %p358 = pneg %p132
        %p359 = pneg %p129
        %p360 = pneg %p153
        %p361 = pneg %p150
        %p362 = pneg %p174
        %p363 = pneg %p171
        %p364 = pneg %p202
        %p365 = pneg %p199
        %s366 = sand.u32 %s189, 1
        %s367 = scalar_lea.sflag [#allocation4], %s366
        %s368 = sand.u32 %s189, 1
        %s369 = smul.addr %s368, 32
        %s370 = scalar_lea.vmem [#allocation8], %s369
        %p371 = pneg %p230
        %p372 = pneg %p227
        %s373 = sand.u32 %s217, 1
        %s374 = scalar_lea.sflag [#allocation10], %s373
        %s375 = sand.u32 %s217, 1
        %s376 = smul.addr %s375, 32
        %s377 = scalar_lea.vmem [#allocation9], %s376
        %s380 = smul.u32 %s36, 128
        %s381 = sshra.s32 %s380, 7
        %s382 = sand.u32 %s380, 127
        %s383 = smul.addr %s381, 4
        %s384 = scalar_lea.vmem %s324, %s383 [#allocation2]
        %v385 = vld [vmem:[%s384] sm:$0xff]
        %v386 = vld [vmem:[%s384 + $0x8] sm:$0xff]
        %v387 = vld [vmem:[%s384 + $0x10] sm:$0xff]
        %v388 = vld [vmem:[%s384 + $0x18] sm:$0xff]
        %s389 = smul.addr %s381, 4
        %s390 = scalar_lea.vmem %s333, %s389 [#allocation5]
        %v391 = vld [vmem:[%s390] sm:$0xff]
        %v392 = vld [vmem:[%s390 + $0x8] sm:$0xff]
        %v393 = vld [vmem:[%s390 + $0x10] sm:$0xff]
        %v394 = vld [vmem:[%s390 + $0x18] sm:$0xff]
        %v395 = vld [vmem:[%s5] sm:$0xff]
        %v396 = vld [vmem:[%s5 + $0x8] sm:$0xff]
        %v397 = vld [vmem:[%s5 + $0x10] sm:$0xff]
        %v398 = vld [vmem:[%s5 + $0x18] sm:$0xff]
        %v403 = vunpack.c.l.b16 %v385
        %v404 = vunpack.c.l.b16 %v386
        %v405 = vunpack.c.l.b16 %v387
        %v406 = vunpack.c.l.b16 %v388
        %v407 = vpack.c.b16 %v404, %v403
        %v408 = vpack.c.b16 %v406, %v405
        %v415 = vunpack.c.l.b16 %v391
        %v416 = vunpack.c.l.b16 %v392
        %v417 = vunpack.c.l.b16 %v393
        %v418 = vunpack.c.l.b16 %v394
        %v419 = vpack.c.b16 %v416, %v415
        %v420 = vpack.c.b16 %v418, %v417
        %v423 = vunpack.c.h.b16 %v385
        %v424 = vunpack.c.h.b16 %v386
        %v425 = vunpack.c.h.b16 %v387
        %v426 = vunpack.c.h.b16 %v388
        %v427 = vpack.c.b16 %v424, %v423
        %v428 = vpack.c.b16 %v426, %v425
        %429 = vrot.lane.b32.xlu0 %v407, 126
        %v430 = vpop.permute.xlu0 %429
        %431 = vrot.lane.b32.xlu0 %v427, 126
        %v432 = vpop.permute.xlu0 %431
        %433 = vrot.lane.b32.xlu0 %v408, 126
        %v434 = vpop.permute.xlu0 %433
        %435 = vrot.lane.b32.xlu0 %v428, 126
        %v436 = vpop.permute.xlu0 %435
        %vm437 = vcmask 1031168
        %v438 = vsel %vm437, %v430, %v432
        %v439 = vsel %vm437, %v434, %v436
        %v442 = vunpack.c.h.b16 %v391
        %v443 = vunpack.c.h.b16 %v392
        %v444 = vunpack.c.h.b16 %v393
        %v445 = vunpack.c.h.b16 %v394
        %v446 = vpack.c.b16 %v443, %v442
        %v447 = vpack.c.b16 %v445, %v444
        %448 = vrot.lane.b32.xlu0 %v419, 126
        %v449 = vpop.permute.xlu0 %448
        %450 = vrot.lane.b32.xlu0 %v446, 126
        %v451 = vpop.permute.xlu0 %450
        %452 = vrot.lane.b32.xlu0 %v420, 126
        %v453 = vpop.permute.xlu0 %452
        %454 = vrot.lane.b32.xlu0 %v447, 126
        %v455 = vpop.permute.xlu0 %454
        %v456 = vsel %vm437, %v449, %v451
        %v457 = vsel %vm437, %v453, %v455
        %460 = vrot.lane.b32.xlu0 %v407, 124
        %v461 = vpop.permute.xlu0 %460
        %462 = vrot.lane.b32.xlu0 %v427, 124
        %v463 = vpop.permute.xlu0 %462
        %464 = vrot.lane.b32.xlu0 %v408, 124
        %v465 = vpop.permute.xlu0 %464
        %466 = vrot.lane.b32.xlu0 %v428, 124
        %v467 = vpop.permute.xlu0 %466
        %vm468 = vcmask 1014784
        %v469 = vsel %vm468, %v461, %v463
        %v470 = vsel %vm468, %v465, %v467
        %473 = vrot.lane.b32.xlu0 %v419, 124
        %v474 = vpop.permute.xlu0 %473
        %475 = vrot.lane.b32.xlu0 %v446, 124
        %v476 = vpop.permute.xlu0 %475
        %477 = vrot.lane.b32.xlu0 %v420, 124
        %v478 = vpop.permute.xlu0 %477
        %479 = vrot.lane.b32.xlu0 %v447, 124
        %v480 = vpop.permute.xlu0 %479
        %v481 = vsel %vm468, %v474, %v476
        %v482 = vsel %vm468, %v478, %v480
        %v485 = vld [vmem:[%s2] sm:$0xff]
        %v486 = vld [vmem:[%s2 + $0x8] sm:$0xff]
        %v487 = vld [vmem:[%s2 + $0x10] sm:$0xff]
        %v488 = vld [vmem:[%s2 + $0x18] sm:$0xff]
        %490 = vset.pattern.permute.xlu0 0
        %491 = vperm.xlu0 %490, %v395
        %v492 = vpop.permute.xlu0 %491
        %495 = vset.pattern.permute.xlu0 0
        %496 = vperm.xlu0 %495, %v396
        %v497 = vpop.permute.xlu0 %496
        %500 = vset.pattern.permute.xlu0 0
        %501 = vperm.xlu0 %500, %v397
        %v502 = vpop.permute.xlu0 %501
        %505 = vset.pattern.permute.xlu0 0
        %506 = vperm.xlu0 %505, %v398
        %v507 = vpop.permute.xlu0 %506
        %v513 = vunpack.c.l.b16 %v485
        %v514 = vunpack.c.h.b16 %v485
        %v515 = vunpack.c.l.b16 %v486
        %v516 = vunpack.c.h.b16 %v486
        %v517 = vunpack.c.l.b16 %v487
        %v518 = vunpack.c.h.b16 %v487
        %v519 = vunpack.c.l.b16 %v488
        %v520 = vunpack.c.h.b16 %v488
        %v521 = vpack.c.b16 %v515, %v513
        %v522 = vpack.c.b16 %v516, %v514
        %v523 = vpack.c.b16 %v519, %v517
        %v524 = vpack.c.b16 %v520, %v518
        %vm527 = vcmask 523264
        %v529 = vsel %vm527, %v522, 0
        %v532 = vsel %vm527, %v524, 0
        %534 = vmatprep.subr.bf16.mxu0 0
        %535 = vmatpush1.bf16.msra.mxu0 %v407
        %536 = vmatprep.subr.bf16.mxu0 0
        %537 = vmatpush1.bf16.msra.mxu0 %v408
        %538 = vmatprep.subr.bf16.mxu0 0
        %539 = vmatpush1.bf16.msra.mxu0 %v419
        %540 = vmatprep.subr.bf16.mxu0 0
        %541 = vmatpush1.bf16.msra.mxu0 %v420
        %542 = vmatprep.subr.bf16.mxu0 0
        %543 = vmatpush1.bf16.msra.mxu0 %v438
        %544 = vmatprep.subr.bf16.mxu0 0
        %545 = vmatpush1.bf16.msra.mxu0 %v439
        %546 = vmatprep.subr.bf16.mxu0 0
        %547 = vmatpush1.bf16.msra.mxu0 %v456
        %548 = vmatprep.subr.bf16.mxu0 0
        %549 = vmatpush1.bf16.msra.mxu0 %v457
        %550 = vmatprep.subr.bf16.mxu0 0
        %551 = vmatpush1.bf16.msra.mxu0 %v469
        %552 = vmatprep.subr.bf16.mxu0 0
        %553 = vmatpush1.bf16.msra.mxu0 %v470
        %554 = vmatprep.subr.bf16.mxu0 0
        %555 = vmatpush1.bf16.msra.mxu0 %v481
        %556 = vmatprep.subr.bf16.mxu0 0
        %557 = vmatpush1.bf16.msra.mxu0 %v482
        %558 = vmatprep.subr.bf16.mxu0 0
        %559 = vmatpush1.bf16.msra.mxu0 0
        %560 = vmatprep.subr.bf16.mxu0 0
        %561 = vmatpush1.bf16.msra.mxu0 0
        %562 = vmatprep.subr.bf16.mxu0 0
        %563 = vmatpush1.bf16.msra.mxu0 0
        %564 = vmatprep.subr.bf16.mxu0 0
        %565 = vmatpush1.bf16.msra.mxu0 0
        %566 = vmatprep.mubr.bf16.mxu0 %v529
        %567 = vmatmul.mubr.bf16.gmra.mrb[0].mxu0 %v521
        %v568 = vpop.f32.mrb[0].mxu0
        %v569 = vadd.f32 %v492, %v568
        %v570 = vpop.f32.mrb[0].mxu0
        %v571 = vpop.f32.mrb[0].mxu0
        %v572 = vadd.f32 %v497, %v571
        %v573 = vpop.f32.mrb[0].mxu0
        %574 = vmatprep.mubr.bf16.mxu0 %v532
        %575 = vmatmul.mubr.bf16.gmra.mrb[0].mxu0 %v523
        %v576 = vpop.f32.mrb[0].mxu0
        %v577 = vadd.f32 %v502, %v576
        %v578 = vpop.f32.mrb[0].mxu0
        %v579 = vpop.f32.mrb[0].mxu0
        %v580 = vadd.f32 %v507, %v579
        %v581 = vpop.f32.mrb[0].mxu0
        %582 = vdwg.mxu0
        %v583 = vxor.u32 %v569, 2147483648
        %v584 = vxor.u32 %v572, 2147483648
        %v585 = vxor.u32 %v577, 2147483648
        %v586 = vxor.u32 %v580, 2147483648
        %v587 = vmul.f32 %v583, 1.442695
        %v588 = vpow.pop %v587
        %v589 = vmul.f32 %v584, 1.442695
        %v590 = vpow.pop %v589
        %v591 = vmul.f32 %v585, 1.442695
        %v592 = vpow.pop %v591
        %v593 = vmul.f32 %v586, 1.442695
        %v594 = vpow.pop %v593
        %v595 = vadd.f32 %v588, 1.0
        %v596 = vadd.f32 %v590, 1.0
        %v597 = vadd.f32 %v592, 1.0
        %v598 = vadd.f32 %v594, 1.0
        %v599 = vrcp.pop %v595
        %v600 = vmul.f32 1.0, %v599
        %v601 = vrcp.pop %v596
        %v602 = vmul.f32 1.0, %v601
        %v603 = vrcp.pop %v597
        %v604 = vmul.f32 1.0, %v603
        %v605 = vrcp.pop %v598
        %v606 = vmul.f32 1.0, %v605
        %607 = vst [vmem:[%s377] sm:$0xff] %v600
        %608 = vst [vmem:[%s377 + $0x8] sm:$0xff] %v602
        %609 = vst [vmem:[%s377 + $0x10] sm:$0xff] %v604
        %610 = vst [vmem:[%s377 + $0x18] sm:$0xff] %v606
        %v611 = vadd.bf16 %v391, 1065369472
        %v612 = vadd.bf16 %v392, 1065369472
        %v613 = vadd.bf16 %v393, 1065369472
        %v614 = vadd.bf16 %v394, 1065369472
        %v615 = vmul.bf16 %v385, %v611
        %v616 = vmul.bf16 %v386, %v612
        %v617 = vmul.bf16 %v387, %v613
        %v618 = vmul.bf16 %v388, %v614
        %v623 = vunpack.c.l.b16 %v615
        %v624 = vunpack.c.l.b16 %v616
        %v625 = vunpack.c.l.b16 %v617
        %v626 = vunpack.c.l.b16 %v618
        %v627 = vpack.c.b16 %v624, %v623
        %v628 = vpack.c.b16 %v626, %v625
        %v631 = vunpack.c.h.b16 %v615
        %v632 = vunpack.c.h.b16 %v616
        %v633 = vunpack.c.h.b16 %v617
        %v634 = vunpack.c.h.b16 %v618
        %v635 = vpack.c.b16 %v632, %v631
        %v636 = vpack.c.b16 %v634, %v633
        %637 = vrot.lane.b32.xlu0 %v627, 126
        %v638 = vpop.permute.xlu0 %637
        %639 = vrot.lane.b32.xlu0 %v635, 126
        %v640 = vpop.permute.xlu0 %639
        %641 = vrot.lane.b32.xlu0 %v628, 126
        %v642 = vpop.permute.xlu0 %641
        %643 = vrot.lane.b32.xlu0 %v636, 126
        %v644 = vpop.permute.xlu0 %643
        %v645 = vsel %vm437, %v638, %v640
        %v646 = vsel %vm437, %v642, %v644
        %649 = vrot.lane.b32.xlu0 %v627, 124
        %v650 = vpop.permute.xlu0 %649
        %651 = vrot.lane.b32.xlu0 %v635, 124
        %v652 = vpop.permute.xlu0 %651
        %653 = vrot.lane.b32.xlu0 %v628, 124
        %v654 = vpop.permute.xlu0 %653
        %655 = vrot.lane.b32.xlu0 %v636, 124
        %v656 = vpop.permute.xlu0 %655
        %v657 = vsel %vm468, %v650, %v652
        %v658 = vsel %vm468, %v654, %v656
        %v661 = vld [vmem:[#allocation7] sm:$0xf]
        %v662 = vld [vmem:[#allocation7 + $0x4] sm:$0xf]
        %v663 = vld [vmem:[#allocation7 + $0x8] sm:$0xf]
        %v664 = vld [vmem:[#allocation7 + $0xc] sm:$0xf]
        %665 = vset.pattern.permute.xlu0 1
        %666 = vperm.xlu0 %665, %v395
        %v667 = vpop.permute.xlu0 %666
        %669 = vset.pattern.permute.xlu0 1
        %670 = vperm.xlu0 %669, %v396
        %v671 = vpop.permute.xlu0 %670
        %673 = vset.pattern.permute.xlu0 1
        %674 = vperm.xlu0 %673, %v397
        %v675 = vpop.permute.xlu0 %674
        %677 = vset.pattern.permute.xlu0 1
        %678 = vperm.xlu0 %677, %v398
        %v679 = vpop.permute.xlu0 %678
        %v685 = vunpack.c.l.b16 %v661
        %v686 = vunpack.c.l.b16 %v662
        %v687 = vunpack.c.l.b16 %v663
        %v688 = vunpack.c.l.b16 %v664
        %v689 = vpack.c.b16 %v686, %v685
        %v690 = vpack.c.b16 %v688, %v687
        %vm691 = vcmask 785408
        %v693 = vsel %vm691, %v689, 0
        %v696 = vsel %vm691, %v690, 0
        %698 = vmatprep.subr.bf16.mxu0 0
        %699 = vmatpush1.bf16.msra.mxu0 %v627
        %700 = vmatprep.subr.bf16.mxu0 0
        %701 = vmatpush1.bf16.msra.mxu0 %v628
        %702 = vmatprep.subr.bf16.mxu0 0
        %703 = vmatpush1.bf16.msra.mxu0 %v645
        %704 = vmatprep.subr.bf16.mxu0 0
        %705 = vmatpush1.bf16.msra.mxu0 %v646
        %706 = vmatprep.subr.bf16.mxu0 0
        %707 = vmatpush1.bf16.msra.mxu0 %v657
        %708 = vmatprep.subr.bf16.mxu0 0
        %709 = vmatpush1.bf16.msra.mxu0 %v658
        %710 = vmatprep.subr.bf16.mxu0 0
        %711 = vmatpush1.bf16.msra.mxu0 0
        %712 = vmatprep.subr.bf16.mxu0 0
        %713 = vmatpush1.bf16.msra.mxu0 0
        %714 = vmatprep.subr.bf16.mxu0 0
        %715 = vmatpush1.bf16.msra.mxu0 0
        %716 = vmatprep.subr.bf16.mxu0 0
        %717 = vmatpush1.bf16.msra.mxu0 0
        %718 = vmatprep.subr.bf16.mxu0 0
        %719 = vmatpush1.bf16.msra.mxu0 0
        %720 = vmatprep.subr.bf16.mxu0 0
        %721 = vmatpush1.bf16.msra.mxu0 0
        %722 = vmatprep.subr.bf16.mxu0 0
        %723 = vmatpush1.bf16.msra.mxu0 0
        %724 = vmatprep.subr.bf16.mxu0 0
        %725 = vmatpush1.bf16.msra.mxu0 0
        %726 = vmatprep.subr.bf16.mxu0 0
        %727 = vmatpush1.bf16.msra.mxu0 0
        %728 = vmatprep.subr.bf16.mxu0 0
        %729 = vmatpush1.bf16.msra.mxu0 0
        %730 = vmatprep.mubr.bf16.mxu0 0
        %731 = vmatmul.mubr.bf16.gmra.mrb[0].mxu0 %v693
        %v732 = vpop.f32.mrb[0].mxu0
        %v733 = vadd.f32 %v667, %v732
        %v734 = vpop.f32.mrb[0].mxu0
        %v735 = vpop.f32.mrb[0].mxu0
        %v736 = vadd.f32 %v671, %v735
        %v737 = vpop.f32.mrb[0].mxu0
        %738 = vmatprep.mubr.bf16.mxu0 0
        %739 = vmatmul.mubr.bf16.gmra.mrb[0].mxu0 %v696
        %v740 = vpop.f32.mrb[0].mxu0
        %v741 = vadd.f32 %v675, %v740
        %v742 = vpop.f32.mrb[0].mxu0
        %v743 = vpop.f32.mrb[0].mxu0
        %v744 = vadd.f32 %v679, %v743
        %v745 = vpop.f32.mrb[0].mxu0
        %746 = vdwg.mxu0
        %v747 = vmax.f32 %v733, 0.0
        %v748 = vmax.f32 %v736, 0.0
        %v749 = vmax.f32 %v741, 0.0
        %v750 = vmax.f32 %v744, 0.0
        %v751 = vld [vmem:[%s4] sm:$0xf]
        %v752 = vld [vmem:[%s4 + $0x4] sm:$0xf]
        %v753 = vld [vmem:[%s4 + $0x8] sm:$0xf]
        %v754 = vld [vmem:[%s4 + $0xc] sm:$0xf]
        %v755 = vpack.c.bf16 %v748, %v747
        %v756 = vpack.c.bf16 %v750, %v749
        %757 = vset.pattern.permute.xlu0 2
        %758 = vperm.xlu0 %757, %v395
        %v759 = vpop.permute.xlu0 %758
        %761 = vset.pattern.permute.xlu0 2
        %762 = vperm.xlu0 %761, %v396
        %v763 = vpop.permute.xlu0 %762
        %765 = vset.pattern.permute.xlu0 2
        %766 = vperm.xlu0 %765, %v397
        %v767 = vpop.permute.xlu0 %766
        %769 = vset.pattern.permute.xlu0 2
        %770 = vperm.xlu0 %769, %v398
        %v771 = vpop.permute.xlu0 %770
        %v777 = vunpack.c.l.b16 %v751
        %v778 = vunpack.c.l.b16 %v752
        %v779 = vunpack.c.l.b16 %v753
        %v780 = vunpack.c.l.b16 %v754
        %v781 = vpack.c.b16 %v778, %v777
        %v782 = vpack.c.b16 %v780, %v779
        %vm783 = vcmask 261120
        %v785 = vsel %vm783, %v781, 0
        %v788 = vsel %vm783, %v782, 0
        %790 = vmatprep.subr.bf16.mxu0 0
        %791 = vmatpush1.bf16.msra.mxu0 %v755
        %792 = vmatprep.subr.bf16.mxu0 0
        %793 = vmatpush1.bf16.msra.mxu0 %v756
        %794 = vmatprep.subr.bf16.mxu0 0
        %795 = vmatpush1.bf16.msra.mxu0 0
        %796 = vmatprep.subr.bf16.mxu0 0
        %797 = vmatpush1.bf16.msra.mxu0 0
        %798 = vmatprep.subr.bf16.mxu0 0
        %799 = vmatpush1.bf16.msra.mxu0 0
        %800 = vmatprep.subr.bf16.mxu0 0
        %801 = vmatpush1.bf16.msra.mxu0 0
        %802 = vmatprep.subr.bf16.mxu0 0
        %803 = vmatpush1.bf16.msra.mxu0 0
        %804 = vmatprep.subr.bf16.mxu0 0
        %805 = vmatpush1.bf16.msra.mxu0 0
        %806 = vmatprep.subr.bf16.mxu0 0
        %807 = vmatpush1.bf16.msra.mxu0 0
        %808 = vmatprep.subr.bf16.mxu0 0
        %809 = vmatpush1.bf16.msra.mxu0 0
        %810 = vmatprep.subr.bf16.mxu0 0
        %811 = vmatpush1.bf16.msra.mxu0 0
        %812 = vmatprep.subr.bf16.mxu0 0
        %813 = vmatpush1.bf16.msra.mxu0 0
        %814 = vmatprep.subr.bf16.mxu0 0
        %815 = vmatpush1.bf16.msra.mxu0 0
        %816 = vmatprep.subr.bf16.mxu0 0
        %817 = vmatpush1.bf16.msra.mxu0 0
        %818 = vmatprep.subr.bf16.mxu0 0
        %819 = vmatpush1.bf16.msra.mxu0 0
        %820 = vmatprep.subr.bf16.mxu0 0
        %821 = vmatpush1.bf16.msra.mxu0 0
        %822 = vmatprep.mubr.bf16.mxu0 0
        %823 = vmatmul.mubr.bf16.gmra.mrb[0].mxu0 %v785
        %v824 = vpop.f32.mrb[0].mxu0
        %v825 = vadd.f32 %v759, %v824
        %v826 = vpop.f32.mrb[0].mxu0
        %v827 = vpop.f32.mrb[0].mxu0
        %v828 = vadd.f32 %v763, %v827
        %v829 = vpop.f32.mrb[0].mxu0
        %830 = vmatprep.mubr.bf16.mxu0 0
        %831 = vmatmul.mubr.bf16.gmra.mrb[0].mxu0 %v788
        %v832 = vpop.f32.mrb[0].mxu0
        %v833 = vadd.f32 %v767, %v832
        %v834 = vpop.f32.mrb[0].mxu0
        %v835 = vpop.f32.mrb[0].mxu0
        %v836 = vadd.f32 %v771, %v835
        %v837 = vpop.f32.mrb[0].mxu0
        %838 = vdwg.mxu0
        %v839 = vunpack.c.l.bf16 %v385
        %v840 = vunpack.c.h.bf16 %v385
        %v841 = vunpack.c.l.bf16 %v386
        %v842 = vunpack.c.h.bf16 %v386
        %v843 = vunpack.c.l.bf16 %v387
        %v844 = vunpack.c.h.bf16 %v387
        %v845 = vunpack.c.l.bf16 %v388
        %v846 = vunpack.c.h.bf16 %v388
        %v847 = vmax.f32 %v825, 0.0
        %v848 = vmax.f32 %v828, 0.0
        %v849 = vmax.f32 %v833, 0.0
        %v850 = vmax.f32 %v836, 0.0
        %855 = vrot.lane.b32.xlu0 %v847, 3
        %v856 = vpop.permute.xlu0 %855
        %857 = vrot.lane.b32.xlu0 %v848, 3
        %v858 = vpop.permute.xlu0 %857
        %859 = vrot.lane.b32.xlu0 %v849, 3
        %v860 = vpop.permute.xlu0 %859
        %861 = vrot.lane.b32.xlu0 %v850, 3
        %v862 = vpop.permute.xlu0 %861
        %v867 = vadd.f32 %v839, %v856
        %v868 = vadd.f32 %v840, %v856
        %v869 = vadd.f32 %v841, %v858
        %v870 = vadd.f32 %v842, %v858
        %v871 = vadd.f32 %v843, %v860
        %v872 = vadd.f32 %v844, %v860
        %v873 = vadd.f32 %v845, %v862
        %v874 = vadd.f32 %v846, %v862
        %883 = vrot.lane.b32.xlu0 %v867, 125
        %v884 = vpop.permute.xlu0 %883
        %885 = vrot.lane.b32.xlu0 %v868, 125
        %v886 = vpop.permute.xlu0 %885
        %887 = vrot.lane.b32.xlu0 %v869, 125
        %v888 = vpop.permute.xlu0 %887
        %889 = vrot.lane.b32.xlu0 %v870, 125
        %v890 = vpop.permute.xlu0 %889
        %891 = vrot.lane.b32.xlu0 %v871, 125
        %v892 = vpop.permute.xlu0 %891
        %893 = vrot.lane.b32.xlu0 %v872, 125
        %v894 = vpop.permute.xlu0 %893
        %895 = vrot.lane.b32.xlu0 %v873, 125
        %v896 = vpop.permute.xlu0 %895
        %897 = vrot.lane.b32.xlu0 %v874, 125
        %v898 = vpop.permute.xlu0 %897
        %vm899 = vcmask 1022976
        %v900 = vsel %vm899, %v884, %v886
        %v901 = vsel %vm899, %v888, %v890
        %v902 = vsel %vm899, %v892, %v894
        %v903 = vsel %vm899, %v896, %v898
        %908 = vst [vmem:[%s370] sm:$0xff] %v900
        %909 = vst [vmem:[%s370 + $0x8] sm:$0xff] %v901
        %910 = vst [vmem:[%s370 + $0x10] sm:$0xff] %v902
        %911 = vst [vmem:[%s370 + $0x18] sm:$0xff] %v903
        %s912 = sand.u32 %s189, 1
        %s913 = scalar_lea.sflag [#allocation4], %s912
        %s914 = sand.u32 %s189, 1
        %s915 = smul.addr %s914, 32
        %s916 = scalar_lea.vmem [#allocation8], %s915
        %s917 = sand.u32 %s217, 1
        %s918 = scalar_lea.sflag [#allocation10], %s917
        %s919 = sand.u32 %s217, 1
        %s920 = smul.addr %s919, 32
        %s921 = scalar_lea.vmem [#allocation9], %s920
        // Predicated region
        $region57: #{tpu_custom_call.1} parent=43 // pred_check
          %p922 = pneg %p199
        $region58: #{tpu_custom_call.1} parent=43 // pred_check_branch
          %924 = sbr.rel (%p922) target = $region60
        $region59: #{tpu_custom_call.1} parent=43 // pred_region
          %s926 = ssub.s32 512, 512
          %927 = vsyncadd %s913, %s926
          %s928 = smul.addr %s35, 4
          %s929 = sadd.s32 %s36, %s928
          %s930 = smul.addr %s929, 128
          %s931 = scalar_lea.hbm %s6, %s930
          %s932 = sshll.u32 %s916, 4
          %s933 = int_to_ptr.vmem [resolvable:$true] %s932
          %938 = dma.vmem_to_hbm [thread:$0]  %s933, 512, %s931, %s913, 128, 128, 8
        $region60: #{tpu_custom_call.1} parent=43 // pred_fallthru
          _
        // Predicated region
        $region61: #{tpu_custom_call.1} parent=43 // pred_check
          %p939 = pneg %p227
        $region62: #{tpu_custom_call.1} parent=43 // pred_check_branch
          %941 = sbr.rel (%p939) target = $region64
        $region63: #{tpu_custom_call.1} parent=43 // pred_region
          %s943 = ssub.s32 512, 512
          %944 = vsyncadd %s918, %s943
          %s945 = smul.addr %s35, 4
          %s946 = sadd.s32 %s36, %s945
          %s947 = smul.addr %s946, 128
          %s948 = scalar_lea.hbm %s7, %s947
          %s949 = sshll.u32 %s921, 4
          %s950 = int_to_ptr.vmem [resolvable:$true] %s949
          %955 = dma.vmem_to_hbm [thread:$0]  %s950, 512, %s948, %s918, 128, 128, 8
        $region64: #{tpu_custom_call.1} parent=43 // pred_fallthru
          _
      $region44: #{tpu_custom_call.1} parent=5 // pred_fallthru
        _
      %p956 = scmp.le.s32.totalorder 2, %s26
      // Predicated region
      $region65: #{tpu_custom_call.1} parent=5 // pred_check
        %p957 = pneg %p956
      $region66: #{tpu_custom_call.1} parent=5 // pred_check_branch
        %959 = sbr.rel (%p957) target = $region68
      $region67: #{tpu_custom_call.1} parent=5 // pred_region
        %s960 = ssub.s32 %s26, 2
        // Predicated region
        $region69: #{tpu_custom_call.1} parent=67 // pred_check
          %p961 = pneg %p205
        $region70: #{tpu_custom_call.1} parent=67 // pred_check_branch
          %963 = sbr.rel (%p961) target = $region72
        $region71: #{tpu_custom_call.1} parent=67 // pred_region
          %s964 = sand.u32 %s190, 1
          %s965 = scalar_lea.sflag [#allocation4], %s964
          %s966 = sand.u32 %s190, 1
          %s967 = smul.addr %s966, 32
          %s968 = scalar_lea.vmem [#allocation8], %s967
          %969 = dma.done %s965, 512
        $region72: #{tpu_custom_call.1} parent=67 // pred_fallthru
          _
        // Predicated region
        $region73: #{tpu_custom_call.1} parent=67 // pred_check
          %p970 = pneg %p233
        $region74: #{tpu_custom_call.1} parent=67 // pred_check_branch
          %972 = sbr.rel (%p970) target = $region76
        $region75: #{tpu_custom_call.1} parent=67 // pred_region
          %s973 = sand.u32 %s218, 1
          %s974 = scalar_lea.sflag [#allocation10], %s973
          %s975 = sand.u32 %s218, 1
          %s976 = smul.addr %s975, 32
          %s977 = scalar_lea.vmem [#allocation9], %s976
          %978 = dma.done %s974, 512
        $region76: #{tpu_custom_call.1} parent=67 // pred_fallthru
          _
      $region68: #{tpu_custom_call.1} parent=5 // pred_fallthru
        _
    $region6: #{tpu_custom_call.1} parent=1 // loop_footer
      %s30 = sadd.s32 1, %s26
    $region7: #{tpu_custom_call.1} parent=1 // loop_footer_branch
      %25 = sbr.rel target = $region3
    $region8: #{tpu_custom_call.1} parent=1 // loop_exit
      _
    %979 = vsyncpa [#allocation3], 1
    %s980 = scalar_lea.sflag [#allocation3], 1
    %981 = vsyncpa %s980, 1
    %982 = vsyncpa [#allocation6], 1
    %s983 = scalar_lea.sflag [#allocation6], 1
    %984 = vsyncpa %s983, 1
    %985 = vsyncpa [#allocation4], 1
    %s986 = scalar_lea.sflag [#allocation4], 1
    %987 = vsyncpa %s986, 1
    %988 = vsyncpa [#allocation10], 1
    %s989 = scalar_lea.sflag [#allocation10], 1
    %990 = vsyncpa %s989, 1

</llo_original>
